<compile_context>
chip_gen: v7x
topology: tpu7x:2x2x1
jax: 0.10.0
libtpu: 0.0.40
codegen_flags: <defaults>
</compile_context>

<pallas_src>
import jax
import jax.numpy as jnp
from jax.experimental import pallas as pl
from jax.experimental.pallas import tpu as pltpu

_LANE = 128
_VMEM_LIMIT = 32 * 1024 * 1024  # safe on v5e/v6e/v7x; footprint here is ~4 MiB


def _copy_kernel(x_ref, o_ref):
    # Lane-dense identity copy: (tn, C) tile, C a full row (multiple of 128
    # for C = 768) -> unmasked full-width vector stores.
    o_ref[...] = x_ref[...]


def _transpose_tile_kernel(x_ref, o_ref):
    # x_ref: (thw, tc), o_ref: (tc, thw).  XLU transpose, hidden under the
    # tile DMA (kernel is purely HBM-bandwidth bound).
    o_ref[...] = x_ref[...].T


def _tile(dim: int, cap: int) -> int:
    # cap is a multiple of 128, so the tile is always (8,128)-legal:
    # either it equals the full dim, or it is a multiple of 128.
    return dim if dim <= cap else cap


def permute_0312(x: jax.Array, *, force_pallas: bool = True) -> jax.Array:
    """Equivalent of torch `x.permute(0, 3, 1, 2)` for an NHWC input.

    x: (N, H, W, C)  ->  (N, C, H, W)
    """
    n, h, w, c = x.shape
    hw = h * w

    if hw == 1:
        if not force_pallas:
            # The permute is pure metadata when H = W = 1: zero data movement.
            return x.reshape(n, c, h, w)

        # Mandated Pallas op: aliased (no new HBM output), row-tiled,
        # lane-dense copy of the (N, C) slab.  Reshapes around it are free.
        # TODO(synk): true donation needs jit(donate_argnums) at the caller.
        x2d = x.reshape(n, c)
        tn = n if n <= 256 else 256  # 256 is a multiple of 8 (sublane-legal)
        out2d = pl.pallas_call(
            _copy_kernel,
            out_shape=jax.ShapeDtypeStruct((n, c), x.dtype),
            grid_spec=pl.GridSpec(
                grid=(pl.cdiv(n, tn),),
                in_specs=[pl.BlockSpec((tn, c), lambda i: (i, 0))],
                out_specs=pl.BlockSpec((tn, c), lambda i: (i, 0)),
            ),
            input_output_aliases={0: 0},
            compiler_params=pltpu.CompilerParams(
                dimension_semantics=("parallel",),
                vmem_limit_bytes=_VMEM_LIMIT,
            ),
        )(x2d)
        return out2d.reshape(n, c, h, w)

    # General case: per-batch tiled (HW, C) -> (C, HW) transpose.
    x3d = x.reshape(n, hw, c)

    if hw < _LANE:
        # Output last dim (thw) is lane-sparse -> masked stores; amortize the
        # penalty with the widest C tile that comfortably fits VMEM.
        thw = hw
        tc = _tile(c, 2048)
    else:
        thw = _tile(hw, 512)
        tc = _tile(c, 512)

    # C-tile axis first so megacore (v7x, 2 TCs) gets a leading parallel axis
    # of extent >= 2; batch (usually 1) goes last.
    grid = (pl.cdiv(c, tc), pl.cdiv(hw, thw), n)

    out3d = pl.pallas_call(
        _transpose_tile_kernel,
        out_shape=jax.ShapeDtypeStruct((n, c, hw), x.dtype),
        grid_spec=pl.GridSpec(
            grid=grid,
            in_specs=[pl.BlockSpec((None, thw, tc), lambda ci, hi, b: (b, hi, ci))],
            out_specs=pl.BlockSpec((None, tc, thw), lambda ci, hi, b: (b, ci, hi)),
        ),
        compiler_params=pltpu.CompilerParams(
            dimension_semantics=("parallel", "parallel", "parallel"),
            vmem_limit_bytes=_VMEM_LIMIT,
        ),
    )(x3d)
    return out3d.reshape(n, c, h, w)


if __name__ == "__main__":
    key = jax.random.PRNGKey(0)
    # Same shape as the PyTorch module's input: [1, 1, 1, 768]
    x425 = jax.random.normal(key, (1, 1, 1, 768), dtype=jnp.float32)

    ref = jnp.transpose(x425, (0, 3, 1, 2))

    # Pallas path (aliased lane-dense copy).
    x426 = permute_0312(x425)
    jax.block_until_ready(x426)
    assert x426.shape == (1, 768, 1, 1), x426.shape
    assert x426.dtype == x425.dtype
    assert bool(jnp.array_equal(x426, ref))

    # Metadata-only fast path (review's preferred hw==1 handling).
    x426_fast = permute_0312(x425, force_pallas=False)
    assert bool(jnp.array_equal(x426_fast, ref))

    # Exercise the general tiled-transpose kernel on a small hw > 1 shape.
    xg = jax.random.normal(jax.random.PRNGKey(0), (2, 8, 8, 256), dtype=jnp.float32)
    yg = permute_0312(xg)
    jax.block_until_ready(yg)
    assert bool(jnp.array_equal(yg, jnp.transpose(xg, (0, 3, 1, 2))))

    print("KERNEL_OK")
</pallas_src>

<mosaic_0001>
module attributes {stable_mosaic.version = 11 : i64} {
  func.func @_copy_kernel(%arg0: i32, %arg1: memref<1x768xf32, #tpu.memory_space<vmem>>, %arg2: memref<1x768xf32, #tpu.memory_space<vmem>>) attributes {dimension_semantics = [#tpu.dimension_semantics<parallel>], iteration_bounds = array<i64: 1>, scalar_prefetch = 0 : i64, scratch_operands = 0 : i64, tpu.core_type = #tpu.core_type<tc>, window_params = [{transform_indices = @transform_0, window_bounds = array<i64: 1, 768>}, {transform_indices = @transform_1, window_bounds = array<i64: 1, 768>}]} {
    %c0 = arith.constant 0 : index
    %c0_0 = arith.constant 0 : index
    %0 = vector.load %arg1[%c0, %c0_0] : memref<1x768xf32, #tpu.memory_space<vmem>>, vector<1x768xf32>
    %c0_1 = arith.constant 0 : index
    %c0_2 = arith.constant 0 : index
    %1 = vector.load %arg2[%c0_1, %c0_2] : memref<1x768xf32, #tpu.memory_space<vmem>>, vector<1x768xf32>
    tpu.vector_store %arg2[%c0_1, %c0_2], %0 {strides = array<i32>} : memref<1x768xf32, #tpu.memory_space<vmem>>, vector<1x768xf32>,
    return
  }
  func.func @transform_0(%arg0: i32) -> (i32, i32) {
    %c0_i32 = arith.constant 0 : i32
    %c0_i32_0 = arith.constant 0 : i32
    return %arg0, %c0_i32 : i32, i32
  }
  func.func @transform_1(%arg0: i32) -> (i32, i32) {
    %c0_i32 = arith.constant 0 : i32
    %c0_i32_0 = arith.constant 0 : i32
    return %arg0, %c0_i32 : i32, i32
  }
}

</mosaic_0001>

<llo_original>
// kernel: tpu_custom_call.1
$region0: #{tpu_custom_call.1}
  #allocation0 [shape = 'u32[]', space=smem, size = 0x4, offset = 0x4, fixed_abs, tag = 'smem constant byte address 0x4 - core index']
  #allocation1 [shape = 'u32[144,128]{1,0:T(1,128)}', space=vmem, size = 0x12000, scoped, tag = 'internal scratch']
  %s0 = inlined_call_operand.hbm [shape: f32[1,768], index: 0, kind: input, shape index: {}, may-alias: {0,1}]
  %s1 = inlined_call_operand.hbm [shape: f32[1,768], index: 1, kind: output, shape index: {}, may-alias: {0,1}]
  %s2 = sld [smem:[#allocation0]]
  $region18: #{tpu_custom_call.1} parent=0
    _
  %s4 = ssub.s32 1, %s2
  %s5 = scalar_select 0, %s4, %s2
  $region1: #{tpu_custom_call.1} parent=0
    #allocation2 [shape = 'u8[3072]{0}', space=vmem, size = 0xc00, scoped, tag = 'input window, operand 0, single buffered']
    #allocation3 [shape = 's32[1]{0}', space=sflag, size = 0x4, scoped, tag = 'scoped memory for tpu_custom_call.1']
    #allocation4 [shape = 's32[1]{0}', space=sflag, size = 0x4, scoped, tag = 'scoped memory for tpu_custom_call.1']
    #allocation5 [shape = 'u8[3072]{0}', space=vmem, size = 0xc00, scoped, tag = 'output window, operand 0, single buffered']
    %6 = vsyncpa [#allocation3], 0
    %7 = vsyncpa [#allocation4], 0
    // Predicated region
    $region2: #{tpu_custom_call.1} parent=1 // pred_check
      _
    $region3: #{tpu_custom_call.1} parent=1 // pred_check_branch
      %9 = sbr.rel (0) target = $region5
    $region4: #{tpu_custom_call.1} parent=1 // pred_region
      %s11 = ssub.s32 96, 96
      %12 = vsyncadd [#allocation3], %s11
      %s14 = sshll.u32 [#allocation2], 4
      %s15 = int_to_ptr.vmem [resolvable:$true] %s14
      %17 = dma.hbm_to_vmem [thread:$0]  %s0, 96, %s15, [#allocation3]
    $region5: #{tpu_custom_call.1} parent=1 // pred_fallthru
      _
    // Predicated region
    $region6: #{tpu_custom_call.1} parent=1 // pred_check
      _
    $region7: #{tpu_custom_call.1} parent=1 // pred_check_branch
      %19 = sbr.rel (0) target = $region9
    $region8: #{tpu_custom_call.1} parent=1 // pred_region
      %20 = dma.done [#allocation3], 96
    $region9: #{tpu_custom_call.1} parent=1 // pred_fallthru
      _
    %v21 = vld [vmem:[#allocation2] sm:$0x3f]
    %v22 = vlaneseq
    %vm23 = vcmp.ge.s32.totalorder %v22, 0
    %vm24 = vcmp.lt.s32.totalorder %v22, 768
    %vm25 = vmand %vm23, %vm24
    %26 = vst.msk [vmem:[#allocation5] sm:$0x3f] %vm25, %v21
    // Predicated region
    $region10: #{tpu_custom_call.1} parent=1 // pred_check
      _
    $region11: #{tpu_custom_call.1} parent=1 // pred_check_branch
      %28 = sbr.rel (0) target = $region13
    $region12: #{tpu_custom_call.1} parent=1 // pred_region
      %s30 = ssub.s32 96, 96
      %31 = vsyncadd [#allocation4], %s30
      %s33 = sshll.u32 [#allocation5], 4
      %s34 = int_to_ptr.vmem [resolvable:$true] %s33
      %36 = dma.vmem_to_hbm [thread:$0]  %s34, 96, %s1, [#allocation4]
    $region13: #{tpu_custom_call.1} parent=1 // pred_fallthru
      _
    // Predicated region
    $region14: #{tpu_custom_call.1} parent=1 // pred_check
      _
    $region15: #{tpu_custom_call.1} parent=1 // pred_check_branch
      %38 = sbr.rel (0) target = $region17
    $region16: #{tpu_custom_call.1} parent=1 // pred_region
      %39 = dma.done [#allocation4], 96
    $region17: #{tpu_custom_call.1} parent=1 // pred_fallthru
      _
    %40 = vsyncpa [#allocation3], 1
    %41 = vsyncpa [#allocation4], 1

</llo_original>
